<compile_context>
chip_gen: v7x
topology: tpu7x:2x2x1
jax: 0.10.0
libtpu: 0.0.40
codegen_flags: <defaults>
</compile_context>

<pallas_src>
import functools

import jax
import jax.numpy as jnp
from jax.experimental import pallas as pl
from jax.experimental.pallas import tpu as pltpu

BN_EPS = 1e-5


# --------------------------------------------------------------------------- helpers
def _vmem_capacity_bytes():
    try:
        return int(pltpu.get_tpu_info().vmem_capacity_bytes)
    except Exception:                         # conservative fallback = v7x per-core VMEM
        return 64 * 1024 * 1024


def _pick_tiling(N, Ci, Co, M):
    """Images-per-block Nb (a divisor of N) + scoped-VMEM limit, per TPU generation."""
    vmem = _vmem_capacity_bytes()
    vmem_limit = min(vmem * 3 // 4, 100 * 1024 * 1024)
    per_image = (Ci + Co) * M * 4                                   # f32 in + out slabs
    nb_budget = max(1, int(vmem_limit * 0.85) // (2 * per_image))   # double-buffered
    nb_target = max(1, (4 * 1024 * 1024) // max(1, Ci * M * 4))     # ~4 MB x block
    nb = max(1, min(N, nb_budget, nb_target))
    if N >= 2:                                # keep >=2 grid steps (v7x megacore split)
        nb = min(nb, N // 2)
    while N % nb:                             # largest divisor of N not above nb
        nb -= 1
    return nb, vmem_limit


def _for_each_image(nb, body):
    """Loop over the images of one block; unrolled when short, fori_loop when long."""
    if nb <= 8:
        for i in range(nb):
            body(i)
    else:
        jax.lax.fori_loop(0, nb, lambda i, c: (body(i), c)[1], 0)


# ---------------- Pass 1: per-channel BN statistics (sum, sum of squares) ----------
def _bn_stats_kernel(x_ref, stat_ref):
    # x_ref: (Nb, Ci, M) batch-blocked block; stat_ref: (Ci, 2) accumulator resident
    # across the (arbitrary) grid axis.
    @pl.when(pl.program_id(0) == 0)
    def _init():
        stat_ref[...] = jnp.zeros_like(stat_ref)

    def one_image(i):
        x = x_ref[i].astype(jnp.float32)                  # (Ci, M), lane-dense
        s = jnp.sum(x, axis=1, keepdims=True)             # (Ci, 1)
        s2 = jnp.sum(x * x, axis=1, keepdims=True)        # (Ci, 1)
        stat_ref[...] += jnp.concatenate([s, s2], axis=1)

    _for_each_image(x_ref.shape[0], one_image)


# --------- Pass 2: fused normalize -> ReLU -> 1x1 conv -> 3x3 pool (stride1 pad1) ---
def _fused_bn_relu_conv_pool_kernel(scale_ref, shift_ref, w_ref, b_ref, mask_ref,
                                    x_ref, o_ref, *, W, is_avg):
    Nb, Ci, M = x_ref.shape
    Co = w_ref.shape[0]

    # Grid-invariant operands: load once per step, outside the per-image loop.
    scale = scale_ref[...]                                # (Ci, 1)
    shift = shift_ref[...]                                # (Ci, 1)
    w = w_ref[...]                                        # (Co, Ci) (1/9 folded for avg)
    b = b_ref[...]                                        # (Co, 1)  (1/9 folded for avg)
    masks = mask_ref[...]                                 # (4, M): left/right/up/down
    m_l, m_r = masks[0:1, :], masks[1:2, :]
    m_u, m_d = masks[2:3, :], masks[3:4, :]

    def one_image(i):
        x = x_ref[i]                                      # (Ci, M), lane-dense
        xr = jnp.maximum(x * scale + shift, 0.0)          # BN + ReLU (VPU, f32)

        # 1x1 conv: VPU FMAs for tiny channel counts; MXU once it actually pays off.
        if Ci >= 64 and Co >= 64:
            y = jnp.dot(w, xr, preferred_element_type=jnp.float32) + b
        else:
            acc = w[:, 0:1] * xr[0:1, :]
            for c in range(1, Ci):
                acc = acc + w[:, c:c + 1] * xr[c:c + 1, :]
            y = acc + b                                   # (Co, M)

        # 3x3 pool, separable on the flat H*W lane axis.  pltpu.roll (XLU) brings in
        # the +-1 (same row) and +-W (adjacent row) neighbors; the wrapped / cross-row
        # lanes are exactly the image-boundary positions killed by the resident masks.
        if is_avg:                                        # masks are {1, 0}; 1/9 in w,b
            hp = y + pltpu.roll(y, 1, 1) * m_l
            hp = hp + pltpu.roll(y, M - 1, 1) * m_r
            out = hp + pltpu.roll(hp, W, 1) * m_u
            out = out + pltpu.roll(hp, M - W, 1) * m_d
        else:                                             # masks are additive {0, -inf}
            hp = jnp.maximum(y, pltpu.roll(y, 1, 1) + m_l)
            hp = jnp.maximum(hp, pltpu.roll(y, M - 1, 1) + m_r)
            out = jnp.maximum(hp, pltpu.roll(hp, W, 1) + m_u)
            out = jnp.maximum(out, pltpu.roll(hp, M - W, 1) + m_d)

        o_ref[i] = out.astype(o_ref.dtype)

    _for_each_image(Nb, one_image)


# ---------------- Wrapper -----------------------------------------------------------
def pool_branch_forward(x_nchw, gamma, beta, w_oihw, bias, avg_or_max):
    """PoolBranch forward. x_nchw: (N, Cin, H, W) f32. Returns (N, Cout, H, W) f32."""
    if avg_or_max not in ("avg", "max"):
        raise ValueError("Unknown pool {}".format(avg_or_max))
    is_avg = avg_or_max == "avg"
    N, Ci, H, W = x_nchw.shape
    Co = w_oihw.shape[0]
    M = H * W

    nb, vmem_limit = _pick_tiling(N, Ci, Co, M)
    steps = N // nb

    # Free reshape: native NCHW contiguity -> (N, Ci, H*W); lane axis = H*W.
    x3 = x_nchw.astype(jnp.float32).reshape(N, Ci, M)
    # TODO(synk): accept/emit bf16 at the HBM boundary when the surrounding model runs
    # bf16 (halves DMA bytes of this HBM-bound op); module spec is f32, so keep f32.

    # Pass 1: batch statistics (sum, sum of squares) with a grid accumulator.
    stats = pl.pallas_call(
        _bn_stats_kernel,
        grid=(steps,),
        in_specs=[pl.BlockSpec((nb, Ci, M), lambda n: (n, 0, 0))],
        out_specs=pl.BlockSpec((Ci, 2), lambda n: (0, 0)),
        out_shape=jax.ShapeDtypeStruct((Ci, 2), jnp.float32),
        compiler_params=pltpu.CompilerParams(
            dimension_semantics=("arbitrary",),
            vmem_limit_bytes=vmem_limit),
    )(x3)

    # Tiny (Ci,) glue math: fold BN into per-channel scale/shift.
    cnt = jnp.float32(N * M)
    mean = stats[:, 0] / cnt
    var = jnp.maximum(stats[:, 1] / cnt - mean * mean, 0.0)   # clamp f32 cancellation
    inv = jax.lax.rsqrt(var + BN_EPS)
    g = gamma.astype(jnp.float32)
    scale = (g * inv).reshape(Ci, 1)
    shift = (beta.astype(jnp.float32) - mean * g * inv).reshape(Ci, 1)

    # 1x1 conv params; for avg pooling fold the 1/9 divisor into weight + bias
    # (pipeline after the conv is linear, padded positions contribute 0 either way).
    w2 = w_oihw.reshape(Co, Ci).astype(jnp.float32)
    b2 = bias.reshape(Co, 1).astype(jnp.float32)
    if is_avg:
        w2 = w2 * (1.0 / 9.0)
        b2 = b2 * (1.0 / 9.0)

    # Grid-invariant neighbor-validity masks for the 3x3 pool (resident kernel input):
    # rows = left / right / up / down neighbor validity per flat H*W position.
    idx = jnp.arange(M, dtype=jnp.int32)
    col, row = idx % W, idx // W
    valid = jnp.stack([col > 0, col < W - 1, row > 0, row < H - 1])      # (4, M) bool
    if is_avg:
        nbr_mask = valid.astype(jnp.float32)                             # multiplicative
    else:
        nbr_mask = jnp.where(valid, 0.0, -jnp.inf).astype(jnp.float32)   # additive

    kern = functools.partial(_fused_bn_relu_conv_pool_kernel, W=W, is_avg=is_avg)
    out3 = pl.pallas_call(
        kern,
        grid=(steps,),
        in_specs=[
            pl.BlockSpec((Ci, 1), lambda n: (0, 0)),           # BN scale    (resident)
            pl.BlockSpec((Ci, 1), lambda n: (0, 0)),           # BN shift    (resident)
            pl.BlockSpec((Co, Ci), lambda n: (0, 0)),          # conv weight (resident)
            pl.BlockSpec((Co, 1), lambda n: (0, 0)),           # conv bias   (resident)
            pl.BlockSpec((4, M), lambda n: (0, 0)),            # pool masks  (resident)
            pl.BlockSpec((nb, Ci, M), lambda n: (n, 0, 0)),    # x, batch-blocked
        ],
        out_specs=pl.BlockSpec((nb, Co, M), lambda n: (n, 0, 0)),
        out_shape=jax.ShapeDtypeStruct((N, Co, M), jnp.float32),
        compiler_params=pltpu.CompilerParams(
            dimension_semantics=("parallel",),                 # megacore split on v7x
            vmem_limit_bytes=vmem_limit),
    )(scale, shift, w2, b2, nbr_mask, x3)

    # Free reshape back to NCHW.
    return out3.reshape(N, Co, H, W)


# ---------------- Pure-JAX reference -------------------------------------------------
def pool_branch_ref(x_nchw, gamma, beta, w_oihw, bias, avg_or_max):
    x = x_nchw.astype(jnp.float32)
    mean = jnp.mean(x, axis=(0, 2, 3), keepdims=True)
    var = jnp.mean((x - mean) ** 2, axis=(0, 2, 3), keepdims=True)
    xn = (x - mean) / jnp.sqrt(var + BN_EPS)
    xn = xn * gamma[None, :, None, None] + beta[None, :, None, None]
    xr = jnp.maximum(xn, 0.0)
    Co, Ci = w_oihw.shape[:2]
    y = jnp.einsum("nchw,oc->nohw", xr, w_oihw.reshape(Co, Ci),
                   precision=jax.lax.Precision.HIGHEST)
    y = y + bias[None, :, None, None]
    N, _, H, W = y.shape
    pad_val = 0.0 if avg_or_max == "avg" else -jnp.inf
    yp = jnp.pad(y, ((0, 0), (0, 0), (1, 1), (1, 1)), constant_values=pad_val)
    wins = [yp[:, :, dh:dh + H, dw:dw + W] for dh in range(3) for dw in range(3)]
    out = wins[0]
    for w_ in wins[1:]:
        out = out + w_ if avg_or_max == "avg" else jnp.maximum(out, w_)
    if avg_or_max == "avg":
        out = out * (1.0 / 9.0)
    return out


if __name__ == "__main__":
    # PoolBranch(in_planes=4, out_planes=8, avg_or_max=...) at small shapes.
    N, Ci, Co, H, W = 2, 4, 8, 16, 16
    key = jax.random.PRNGKey(0)
    kx, kg, kb, kw, kbias = jax.random.split(key, 5)

    x = jax.random.normal(kx, (N, Ci, H, W), dtype=jnp.float32)
    gamma = 1.0 + 0.1 * jax.random.normal(kg, (Ci,), dtype=jnp.float32)
    beta = 0.1 * jax.random.normal(kb, (Ci,), dtype=jnp.float32)
    w = 0.2 * jax.random.normal(kw, (Co, Ci, 1, 1), dtype=jnp.float32)
    b = 0.05 * jax.random.normal(kbias, (Co,), dtype=jnp.float32)

    ok = True
    for mode in ("avg", "max"):
        out = pool_branch_forward(x, gamma, beta, w, b, mode)
        out = jax.block_until_ready(out)
        ref = pool_branch_ref(x, gamma, beta, w, b, mode)
        ref = jax.block_until_ready(ref)
        if out.shape != (N, Co, H, W):
            ok = False
        if not jnp.allclose(out, ref, rtol=1e-3, atol=1e-3):
            ok = False

    print("KERNEL_OK" if ok else "KERNEL_MISMATCH")
</pallas_src>

<mosaic_0001>
module attributes {stable_mosaic.version = 11 : i64} {
  func.func @_bn_stats_kernel(%arg0: i32, %arg1: memref<1x4x256xf32, #tpu.memory_space<vmem>>, %arg2: memref<4x2xf32, #tpu.memory_space<vmem>>) attributes {dimension_semantics = [#tpu.dimension_semantics<arbitrary>], iteration_bounds = array<i64: 2>, scalar_prefetch = 0 : i64, scratch_operands = 0 : i64, tpu.core_type = #tpu.core_type<tc>, window_params = [{transform_indices = @transform_0, window_bounds = array<i64: 1, 4, 256>}, {pipeline_mode = #tpu.pipeline_mode<synchronous>, transform_indices = @transform_1, window_bounds = array<i64: 4, 2>}]} {
    %c0_i32 = arith.constant 0 : i32
    %0 = arith.cmpi eq, %arg0, %c0_i32 : i32
    %1 = arith.extui %0 : i1 to i32
    %c0_i32_0 = arith.constant 0 : i32
    %2 = arith.cmpi ne, %1, %c0_i32_0 : i32
    scf.if %2 {
      %cst_8 = arith.constant 0.000000e+00 : f32
      %14 = vector.broadcast %cst_8 : f32 to vector<4x2xf32>
      %c0_9 = arith.constant 0 : index
      %c0_10 = arith.constant 0 : index
      %15 = vector.load %arg2[%c0_9, %c0_10] : memref<4x2xf32, #tpu.memory_space<vmem>>, vector<4x2xf32>
      tpu.vector_store %arg2[%c0_9, %c0_10], %14 {strides = array<i32>} : memref<4x2xf32, #tpu.memory_space<vmem>>, vector<4x2xf32>,
    } else {
    }
    %c0 = arith.constant 0 : index
    %c0_1 = arith.constant 0 : index
    %c0_2 = arith.constant 0 : index
    %3 = vector.load %arg1[%c0, %c0_1, %c0_2] : memref<1x4x256xf32, #tpu.memory_space<vmem>>, vector<1x4x256xf32>
    %4 = vector.shape_cast %3 : vector<1x4x256xf32> to vector<4x256xf32>
    %cst = arith.constant dense<0.000000e+00> : vector<4xf32>
    %5 = vector.multi_reduction <add>, %4, %cst [1] : vector<4x256xf32> to vector<4xf32>
    %6 = vector.shape_cast %5 : vector<4xf32> to vector<4x1xf32>
    %7 = arith.mulf %4, %4 : vector<4x256xf32>
    %cst_3 = arith.constant dense<0.000000e+00> : vector<4xf32>
    %8 = vector.multi_reduction <add>, %7, %cst_3 [1] : vector<4x256xf32> to vector<4xf32>
    %9 = vector.shape_cast %8 : vector<4xf32> to vector<4x1xf32>
    %c0_4 = arith.constant 0 : index
    %c0_5 = arith.constant 0 : index
    %10 = vector.load %arg2[%c0_4, %c0_5] : memref<4x2xf32, #tpu.memory_space<vmem>>, vector<4x2xf32>
    %11 = tpu.concatenate %6, %9 in 1 : vector<4x1xf32>, vector<4x1xf32> -> vector<4x2xf32>
    %12 = arith.addf %10, %11 : vector<4x2xf32>
    %c0_6 = arith.constant 0 : index
    %c0_7 = arith.constant 0 : index
    %13 = vector.load %arg2[%c0_6, %c0_7] : memref<4x2xf32, #tpu.memory_space<vmem>>, vector<4x2xf32>
    tpu.vector_store %arg2[%c0_6, %c0_7], %12 {strides = array<i32>} : memref<4x2xf32, #tpu.memory_space<vmem>>, vector<4x2xf32>,
    return
  }
  func.func @transform_0(%arg0: i32) -> (i32, i32, i32) {
    %c0_i32 = arith.constant 0 : i32
    %c0_i32_0 = arith.constant 0 : i32
    %c0_i32_1 = arith.constant 0 : i32
    return %arg0, %c0_i32, %c0_i32_0 : i32, i32, i32
  }
  func.func @transform_1(%arg0: i32) -> (i32, i32) {
    %c0_i32 = arith.constant 0 : i32
    %c0_i32_0 = arith.constant 0 : i32
    %c0_i32_1 = arith.constant 0 : i32
    return %c0_i32, %c0_i32_0 : i32, i32
  }
}

</mosaic_0001>

<llo_original>
// kernel: tpu_custom_call.1
$region0: #{tpu_custom_call.1}
  #allocation0 [shape = 'u32[]', space=smem, size = 0x4, offset = 0x4, fixed_abs, tag = 'smem constant byte address 0x4 - core index']
  #allocation1 [shape = 'u32[144,128]{1,0:T(1,128)}', space=vmem, size = 0x12000, scoped, tag = 'internal scratch']
  %s0 = inlined_call_operand.hbm [shape: f32[2,4,256], index: 0, kind: input, shape index: {}]
  %s1 = inlined_call_operand.vmem [shape: f32[4,2], index: 1, kind: output, shape index: {}]
  %s2 = sld [smem:[#allocation0]]
  $region45: #{tpu_custom_call.1} parent=0
    _
  %s4 = ssub.s32 1, %s2
  %s5 = scalar_select 0, %s4, %s2
  $region1: #{tpu_custom_call.1} parent=0
    #allocation2 [shape = 'u8[8192]{0}', space=vmem, size = 0x2000, scoped, tag = 'input window, operand 0']
    #allocation3 [shape = 's32[2]{0}', space=sflag, size = 0x8, scoped, tag = 'scoped memory for tpu_custom_call.1']
    %6 = vsyncpa [#allocation3], 0
    %s7 = scalar_lea.sflag [#allocation3], 1
    %8 = vsyncpa %s7, 0
    loop: start=0, step=1, limit=4
    $region2: #{tpu_custom_call.1} parent=1 // loop_pre_header
      _
    $region3: #{tpu_custom_call.1} parent=1 // loop_header
      %s10 = sphi 0, %s14
      %p11 = scmp.ge.s32.totalorder %s10, 4
      %s20 = sphi 0, %s22
      %s23 = sphi 0, %s20
      %s24 = sphi 0, %s23
      %s40 = sphi 0, %s24
      %s44 = sphi 0, %s44
      %s46 = sphi 0, %s44
      %s47 = sphi 0, %s46
      %s61 = sphi 0, %s47
    $region4: #{tpu_custom_call.1} parent=1 // loop_header_branch
      %13 = sbr.rel (%p11) target = $region8
    $region5: #{tpu_custom_call.1} parent=1 // loop_body
      %s15 = ssub.s32 %s10, 1
      %s16 = ssub.s32 %s10, 2
      %s17 = sadd.s32 %s10, 1
      %s18 = ssub.s32 %s10, %s17
      %p19 = scmp.eq.s32.totalorder %s18, 0
      %s21 = sadd.s32 %s20, 1
      %s22 = scalar_select %p19, %s20, %s21
      %p25 = pneg %p19
      %p26 = scmp.eq.s32.totalorder %s10, 1
      %p27 = por %p25, %p26
      %p28 = scmp.ne.s32.totalorder %s20, %s23
      %p29 = scmp.eq.s32.totalorder %s10, 0
      %p30 = por %p28, %p29
      %p31 = scmp.ne.s32.totalorder %s20, %s23
      %p32 = scmp.eq.s32.totalorder %s15, 1
      %p33 = por %p31, %p32
      %p34 = scmp.ne.s32.totalorder %s23, %s24
      %p35 = scmp.eq.s32.totalorder %s15, 0
      %p36 = por %p34, %p35
      %p37 = scmp.ne.s32.totalorder %s23, %s24
      %p38 = scmp.eq.s32.totalorder %s16, 1
      %p39 = por %p37, %p38
      %p41 = scmp.ne.s32.totalorder %s24, %s40
      %p42 = scmp.eq.s32.totalorder %s16, 0
      %p43 = por %p41, %p42
      %s45 = sadd.s32 %s44, 1
      %p48 = scmp.eq.s32.totalorder %s10, 1
      %p49 = scmp.ne.s32.totalorder %s44, %s46
      %p50 = scmp.eq.s32.totalorder %s10, 0
      %p51 = por %p49, %p50
      %p52 = scmp.ne.s32.totalorder %s44, %s46
      %p53 = scmp.eq.s32.totalorder %s15, 1
      %p54 = por %p52, %p53
      %p55 = scmp.ne.s32.totalorder %s46, %s47
      %p56 = scmp.eq.s32.totalorder %s15, 0
      %p57 = por %p55, %p56
      %p58 = scmp.ne.s32.totalorder %s46, %s47
      %p59 = scmp.eq.s32.totalorder %s16, 1
      %p60 = por %p58, %p59
      %p62 = scmp.ne.s32.totalorder %s47, %s61
      %p63 = scmp.eq.s32.totalorder %s16, 0
      %p64 = por %p62, %p63
      %p65 = scmp.le.s32.totalorder 1, %s10
      %p66 = scmp.lt.s32.totalorder %s10, 3
      %p67 = pnand %p65, %p66
      %p68 = pneg %p67
      // Predicated region
      $region9: #{tpu_custom_call.1} parent=5 // pred_check
        _
      $region10: #{tpu_custom_call.1} parent=5 // pred_check_branch
        %70 = sbr.rel (%p67) target = $region12
      $region11: #{tpu_custom_call.1} parent=5 // pred_region
        %s71 = ssub.s32 %s10, 1
      $region12: #{tpu_custom_call.1} parent=5 // pred_fallthru
        _
      %p72 = scmp.lt.s32.totalorder %s10, 2
      // Predicated region
      $region13: #{tpu_custom_call.1} parent=5 // pred_check
        %p73 = pneg %p72
      $region14: #{tpu_custom_call.1} parent=5 // pred_check_branch
        %75 = sbr.rel (%p73) target = $region16
      $region15: #{tpu_custom_call.1} parent=5 // pred_region
        // Predicated region
        $region17: #{tpu_custom_call.1} parent=15 // pred_check
          %p76 = pneg %p30
        $region18: #{tpu_custom_call.1} parent=15 // pred_check_branch
          %78 = sbr.rel (%p76) target = $region20
        $region19: #{tpu_custom_call.1} parent=15 // pred_region
          %s79 = sand.u32 %s20, 1
          %s80 = scalar_lea.sflag [#allocation3], %s79
          %s81 = sand.u32 %s20, 1
          %s82 = smul.addr %s81, 8
          %s83 = scalar_lea.vmem [#allocation2], %s82
          %s85 = ssub.s32 128, 128
          %86 = vsyncadd %s80, %s85
          %s87 = smul.addr %s10, 2
          %s88 = smul.addr %s87, 64
          %s89 = scalar_lea.hbm %s0, %s88
          %s91 = sshll.u32 %s83, 4
          %s92 = int_to_ptr.vmem [resolvable:$true] %s91
          %94 = dma.hbm_to_vmem [thread:$0]  %s89, 128, %s92, %s80
        $region20: #{tpu_custom_call.1} parent=15 // pred_fallthru
          _
      $region16: #{tpu_custom_call.1} parent=5 // pred_fallthru
        _
      %p95 = scmp.le.s32.totalorder 1, %s10
      %p96 = scmp.lt.s32.totalorder %s10, 3
      %p97 = pnand %p95, %p96
      %p98 = pneg %p97
      // Predicated region
      $region21: #{tpu_custom_call.1} parent=5 // pred_check
        _
      $region22: #{tpu_custom_call.1} parent=5 // pred_check_branch
        %100 = sbr.rel (%p97) target = $region24
      $region23: #{tpu_custom_call.1} parent=5 // pred_region
        %s101 = ssub.s32 %s10, 1
        %s102 = sand.u32 %s23, 1
        %s103 = scalar_lea.sflag [#allocation3], %s102
        %s104 = sand.u32 %s23, 1
        %s105 = smul.addr %s104, 8
        %s106 = scalar_lea.vmem [#allocation2], %s105
        // Predicated region
        $region25: #{tpu_custom_call.1} parent=23 // pred_check
          %p107 = pneg %p36
        $region26: #{tpu_custom_call.1} parent=23 // pred_check_branch
          %109 = sbr.rel (%p107) target = $region28
        $region27: #{tpu_custom_call.1} parent=23 // pred_region
          %110 = dma.done %s103, 128
        $region28: #{tpu_custom_call.1} parent=23 // pred_fallthru
          _
        %s111 = sand.u32 %s23, 1
        %s112 = scalar_lea.sflag [#allocation3], %s111
        %s113 = sand.u32 %s23, 1
        %s114 = smul.addr %s113, 8
        %s115 = scalar_lea.vmem [#allocation2], %s114
        %p116 = pneg %p36
        %p117 = pneg %p33
        %p118 = pneg %p57
        %p119 = pneg %p54
        %p120 = scmp.eq.s32.totalorder %s15, 0
        // Predicated region
        $region29: #{tpu_custom_call.1} parent=23 // pred_check
          %p121 = pneg %p120
        $region30: #{tpu_custom_call.1} parent=23 // pred_check_branch
          %123 = sbr.rel (%p121) target = $region32
        $region31: #{tpu_custom_call.1} parent=23 // pred_region
          %vm124 = vcmask 11264
          %125 = vst.msk [vmem:[%s1] sm:$0xf] %vm124, 0.0
        $region32: #{tpu_custom_call.1} parent=23 // pred_fallthru
          _
        %v126 = vld [vmem:[%s106] sm:$0xff]
        %v128 = vcombine.high %v126, %v126
        %vm130 = vcmask 1043456
        %v131 = vsel %vm130, %v126, 0.0
        %v132 = vsel %vm130, %v128, 0.0
        %v133 = vadd.f32 %v131, %v132
        %134 = vadd.xlane.f32.xlu0 %v133
        %v135 = vpop.xlane.xlu0 %134
        %v136 = vmul.f32 %v126, %v126
        %v138 = vcombine.high %v136, %v136
        %v140 = vsel %vm130, %v136, 0.0
        %v141 = vsel %vm130, %v138, 0.0
        %v142 = vadd.f32 %v140, %v141
        %143 = vadd.xlane.f32.xlu0 %v142
        %v144 = vpop.xlane.xlu0 %143
        %v145 = vld [vmem:[%s1] sm:$0xf]
        %vm146 = vcmask 7168
        %v147 = vsel %vm146, %v135, %v144
        %v148 = vadd.f32 %v145, %v147
        %vm149 = vcmask 11264
        %150 = vst.msk [vmem:[%s1] sm:$0xf] %vm149, %v148
        // Predicated region
        $region33: #{tpu_custom_call.1} parent=23 // pred_check
          %p151 = pneg %p54
        $region34: #{tpu_custom_call.1} parent=23 // pred_check_branch
          %153 = sbr.rel (%p151) target = $region36
        $region35: #{tpu_custom_call.1} parent=23 // pred_region
          _
        $region36: #{tpu_custom_call.1} parent=23 // pred_fallthru
          _
        // Predicated region
        $region37: #{tpu_custom_call.1} parent=23 // pred_check
          %p154 = pneg %p54
        $region38: #{tpu_custom_call.1} parent=23 // pred_check_branch
          %156 = sbr.rel (%p154) target = $region40
        $region39: #{tpu_custom_call.1} parent=23 // pred_region
          _
        $region40: #{tpu_custom_call.1} parent=23 // pred_fallthru
          _
      $region24: #{tpu_custom_call.1} parent=5 // pred_fallthru
        _
      %p157 = scmp.le.s32.totalorder 2, %s10
      // Predicated region
      $region41: #{tpu_custom_call.1} parent=5 // pred_check
        %p158 = pneg %p157
      $region42: #{tpu_custom_call.1} parent=5 // pred_check_branch
        %160 = sbr.rel (%p158) target = $region44
      $region43: #{tpu_custom_call.1} parent=5 // pred_region
        %s161 = ssub.s32 %s10, 2
      $region44: #{tpu_custom_call.1} parent=5 // pred_fallthru
        _
    $region6: #{tpu_custom_call.1} parent=1 // loop_footer
      %s14 = sadd.s32 1, %s10
    $region7: #{tpu_custom_call.1} parent=1 // loop_footer_branch
      %9 = sbr.rel target = $region3
    $region8: #{tpu_custom_call.1} parent=1 // loop_exit
      _
    %162 = vsyncpa [#allocation3], 1
    %s163 = scalar_lea.sflag [#allocation3], 1
    %164 = vsyncpa %s163, 1

</llo_original>
